<compile_context>
chip_gen: v7x
topology: tpu7x:2x2x1
jax: 0.10.0
libtpu: 0.0.40
codegen_flags: <defaults>
</compile_context>

<pallas_src>
import jax
import jax.numpy as jnp
from jax import lax
from jax.experimental import pallas as pl
from jax.experimental.pallas import tpu as pltpu


def _self_attention_kernel(wq_ref, bq_ref, wk_ref, bk_ref, wv_ref, bv_ref,
                           xf_ref, xb_ref, out_ref, q_sc, v_sc):
    """One (batch, key-column-block) grid step.

    Layout is channel-major: x is (C, N) with N = H*W on the lane axis.
    Softmax (torch dim=-2) is over the query axis = axis 0 of the (N, bn)
    score block; normalization is deferred to a (1, bn) reciprocal on o.
    """
    j = pl.program_id(1)

    # Q / V projections depend on *all* pixels; compute them once per batch
    # element (the inner grid axis j iterates key-column blocks) into scratch.
    @pl.when(j == 0)
    def _():
        x_all = xf_ref[...].astype(jnp.bfloat16)                          # (C, N)
        q = jnp.dot(wq_ref[...], x_all,
                    preferred_element_type=jnp.float32) + bq_ref[...]     # (C8, N)
        v = jnp.dot(wv_ref[...], x_all,
                    preferred_element_type=jnp.float32) + bv_ref[...]     # (C, N)
        q_sc[...] = q.astype(jnp.bfloat16)
        v_sc[...] = v.astype(jnp.bfloat16)

    x_blk = xb_ref[...]                                                   # (C, bn) f32
    k = jnp.dot(wk_ref[...], x_blk.astype(jnp.bfloat16),
                preferred_element_type=jnp.float32) + bk_ref[...]         # (C8, bn)

    # s[i, jj] = sum_c q[c, i] * k[c, jj]  (i = query pixel, jj = key pixel).
    # Contract over the channel axis directly -- no k^T materialization.
    s = lax.dot_general(q_sc[...], k.astype(jnp.bfloat16),
                        dimension_numbers=(((0,), (0,)), ((), ())),
                        preferred_element_type=jnp.float32)               # (N, bn)

    # torch.nn.Softmax(dim=-2): normalize over the query axis (axis 0).
    # Softmax arithmetic in f32; normalization deferred past the o-matmul.
    s_max = jnp.max(s, axis=0, keepdims=True)                             # (1, bn)
    e = jnp.exp(s - s_max)                                                # (N, bn)
    l = jnp.sum(e, axis=0, keepdims=True)                                 # (1, bn)

    # o[c, jj] = sum_i v[c, i] * attn[i, jj], with attn = e / l applied after.
    o_un = jnp.dot(v_sc[...], e.astype(jnp.bfloat16),
                   preferred_element_type=jnp.float32)                    # (C, bn)

    inv_l = pl.reciprocal(l, approx=True)                                 # (1, bn)
    # gamma is folded into wv/bv by the wrapper, so the residual is just x + o.
    out_ref[...] = (x_blk + o_un * inv_l).astype(out_ref.dtype)


def _pick_key_block(n, target=512):
    """Largest lane-aligned (multiple of 128) divisor of n that is <= target."""
    if n <= target:
        return n
    for bn in range(target - target % 128, 0, -128):
        if n % bn == 0:
            return bn
    return n  # fall back to a single full-N pass


def self_attention(x_nchw, params, *, key_block=512):
    wq, bq, wk, bk, wv, bv, gamma = params
    B, C, H, W = x_nchw.shape
    N = H * W
    C8 = wq.shape[0]

    # NCHW -> (B, C, N): a pure reshape, no HBM transpose passes.
    x_bcn = x_nchw.reshape(B, C, N)

    # Fold gamma into the value projection and store MXU-side weights in bf16
    # (f32 accumulation happens in-kernel via preferred_element_type).
    g = gamma.reshape(())
    wq_b = wq.astype(jnp.bfloat16)
    wk_b = wk.astype(jnp.bfloat16)
    wv_b = (g * wv).astype(jnp.bfloat16)
    bq_f = bq.astype(jnp.float32)
    bk_f = bk.astype(jnp.float32)
    bv_f = (g * bv).astype(jnp.float32)

    bn = _pick_key_block(N, key_block)
    nj = N // bn

    # VMEM budget estimate -> raise the scoped limit when full-N blocks need it.
    f32b = 4
    est = (2 * f32b * C * N              # full-x block (double buffered)
           + 4 * f32b * C * bn           # x column block + out block (double buffered)
           + 2 * (2 * C8 * C + C * C)    # bf16 weights
           + f32b * (2 * C8 + C)         # biases
           + 2 * (C8 + C) * N            # bf16 q / (gamma*v) scratch
           + 3 * f32b * N * bn)          # s / e / o intermediates
    vmem_limit = int(min(max(2 * est, 32 * 1024 * 1024), 64 * 1024 * 1024))

    # NOTE: block_shape entry None == pl.Squeezed(): the size-1 batch dim is
    # squeezed out so kernel refs are 2-D (no ref[0] relayout).
    out_bcn = pl.pallas_call(
        _self_attention_kernel,
        out_shape=jax.ShapeDtypeStruct((B, C, N), x_nchw.dtype),
        grid_spec=pltpu.PrefetchScalarGridSpec(
            num_scalar_prefetch=0,
            grid=(B, nj),
            in_specs=[
                pl.BlockSpec((C8, C), lambda b, j: (0, 0)),           # wq (bf16)
                pl.BlockSpec((C8, 1), lambda b, j: (0, 0)),           # bq
                pl.BlockSpec((C8, C), lambda b, j: (0, 0)),           # wk (bf16)
                pl.BlockSpec((C8, 1), lambda b, j: (0, 0)),           # bk
                pl.BlockSpec((C, C), lambda b, j: (0, 0)),            # gamma*wv (bf16)
                pl.BlockSpec((C, 1), lambda b, j: (0, 0)),            # gamma*bv
                pl.BlockSpec((None, C, N), lambda b, j: (b, 0, 0)),   # x, all pixels
                pl.BlockSpec((None, C, bn), lambda b, j: (b, 0, j)),  # x, key columns
            ],
            out_specs=pl.BlockSpec((None, C, bn), lambda b, j: (b, 0, j)),
            scratch_shapes=[
                pltpu.VMEM((C8, N), jnp.bfloat16),   # q (all pixels)
                pltpu.VMEM((C, N), jnp.bfloat16),    # gamma-scaled v (all pixels)
            ],
        ),
        compiler_params=pltpu.CompilerParams(
            dimension_semantics=("parallel", "arbitrary"),
            vmem_limit_bytes=vmem_limit,
        ),
    )(wq_b, bq_f, wk_b, bk_f, wv_b, bv_f, x_bcn, x_bcn)

    return out_bcn.reshape(B, C, H, W)


def reference(x_nchw, params):
    # Pure-JAX f32 reference mirroring the PyTorch forward exactly.
    wq, bq, wk, bk, wv, bv, gamma = params
    B, C, H, W = x_nchw.shape
    N = H * W
    xc = x_nchw.reshape(B, C, N).astype(jnp.float32)
    q = jnp.einsum('oc,bcn->bon', wq, xc) + bq[None]        # (B, C8, N)
    k = jnp.einsum('oc,bcn->bon', wk, xc) + bk[None]        # (B, C8, N)
    v = jnp.einsum('oc,bcn->bon', wv, xc) + bv[None]        # (B, C, N)
    s = jnp.einsum('bci,bcj->bij', q, k)                    # (B, N, N) i=query, j=key
    attn = jax.nn.softmax(s, axis=-2)                       # softmax over query axis
    o = jnp.einsum('bci,bij->bcj', v, attn)                 # (B, C, N)
    out = xc + gamma.reshape(()) * o
    return out.reshape(B, C, H, W).astype(x_nchw.dtype)


if __name__ == "__main__":
    # Small shapes consistent with the module: input_nc must be divisible by 8.
    B, C, H, W = 2, 32, 8, 8
    C8 = C // 8

    key = jax.random.PRNGKey(0)
    kx, kwq, kbq, kwk, kbk, kwv, kbv = jax.random.split(key, 7)

    x = jax.random.normal(kx, (B, C, H, W), dtype=jnp.float32)

    # Conv2d(kernel_size=1) weights of shape (out, in, 1, 1) stored as (out, in)
    # for left-multiplication in the (C, N) layout. Deterministic init.
    wq = jax.random.normal(kwq, (C8, C), dtype=jnp.float32) * 0.1
    bq = jax.random.normal(kbq, (C8, 1), dtype=jnp.float32) * 0.1
    wk = jax.random.normal(kwk, (C8, C), dtype=jnp.float32) * 0.1
    bk = jax.random.normal(kbk, (C8, 1), dtype=jnp.float32) * 0.1
    wv = jax.random.normal(kwv, (C, C),  dtype=jnp.float32) * 0.1
    bv = jax.random.normal(kbv, (C, 1),  dtype=jnp.float32) * 0.1
    # PyTorch inits gamma to 0 (output == x); use 0.5 so the attention path is
    # actually exercised by the check.
    gamma = jnp.full((1, 1), 0.5, dtype=jnp.float32)

    params = (wq, bq, wk, bk, wv, bv, gamma)

    out = self_attention(x, params)
    out = jax.block_until_ready(out)

    ref = reference(x, params)
    assert out.shape == (B, C, H, W)
    # bf16 MXU operands (with f32 accumulation) -> looser tolerance than pure f32.
    max_diff = float(jnp.max(jnp.abs(out - ref)))
    assert jnp.allclose(out, ref, atol=3e-2, rtol=3e-2), (
        f"mismatch vs reference: max |diff| = {max_diff}")

    print("KERNEL_OK")
</pallas_src>

<mosaic_0001>
module attributes {stable_mosaic.version = 11 : i64} {
  func.func @_self_attention_kernel(%arg0: i32, %arg1: i32, %arg2: memref<4x32xbf16, #tpu.memory_space<vmem>>, %arg3: memref<4x1xf32, #tpu.memory_space<vmem>>, %arg4: memref<4x32xbf16, #tpu.memory_space<vmem>>, %arg5: memref<4x1xf32, #tpu.memory_space<vmem>>, %arg6: memref<32x32xbf16, #tpu.memory_space<vmem>>, %arg7: memref<32x1xf32, #tpu.memory_space<vmem>>, %arg8: memref<1x32x64xf32, #tpu.memory_space<vmem>>, %arg9: memref<1x32x64xf32, #tpu.memory_space<vmem>>, %arg10: memref<1x32x64xf32, #tpu.memory_space<vmem>>, %arg11: memref<4x64xbf16, #tpu.memory_space<vmem>>, %arg12: memref<32x64xbf16, #tpu.memory_space<vmem>>) attributes {dimension_semantics = [#tpu.dimension_semantics<parallel>, #tpu.dimension_semantics<arbitrary>], iteration_bounds = array<i64: 2, 1>, scalar_prefetch = 0 : i64, scratch_operands = 2 : i64, tpu.core_type = #tpu.core_type<tc>, window_params = [{pipeline_mode = #tpu.pipeline_mode<synchronous>, transform_indices = @transform_0, window_bounds = array<i64: 4, 32>}, {pipeline_mode = #tpu.pipeline_mode<synchronous>, transform_indices = @transform_1, window_bounds = array<i64: 4, 1>}, {pipeline_mode = #tpu.pipeline_mode<synchronous>, transform_indices = @transform_2, window_bounds = array<i64: 4, 32>}, {pipeline_mode = #tpu.pipeline_mode<synchronous>, transform_indices = @transform_3, window_bounds = array<i64: 4, 1>}, {pipeline_mode = #tpu.pipeline_mode<synchronous>, transform_indices = @transform_4, window_bounds = array<i64: 32, 32>}, {pipeline_mode = #tpu.pipeline_mode<synchronous>, transform_indices = @transform_5, window_bounds = array<i64: 32, 1>}, {transform_indices = @transform_6, window_bounds = array<i64: 1, 32, 64>}, {transform_indices = @transform_7, window_bounds = array<i64: 1, 32, 64>}, {transform_indices = @transform_8, window_bounds = array<i64: 1, 32, 64>}]} {
    %c0_i32 = arith.constant 0 : i32
    %0 = arith.cmpi eq, %arg1, %c0_i32 : i32
    %1 = arith.extui %0 : i1 to i32
    %c0_i32_0 = arith.constant 0 : i32
    %2 = arith.cmpi ne, %1, %c0_i32_0 : i32
    scf.if %2 {
      %c0_18 = arith.constant 0 : index
      %c0_19 = arith.constant 0 : index
      %c0_20 = arith.constant 0 : index
      %31 = vector.load %arg8[%c0_18, %c0_19, %c0_20] : memref<1x32x64xf32, #tpu.memory_space<vmem>>, vector<1x32x64xf32>
      %32 = vector.shape_cast %31 : vector<1x32x64xf32> to vector<32x64xf32>
      %33 = arith.truncf %32 : vector<32x64xf32> to vector<32x64xbf16>
      %c0_21 = arith.constant 0 : index
      %c0_22 = arith.constant 0 : index
      %34 = vector.load %arg2[%c0_21, %c0_22] : memref<4x32xbf16, #tpu.memory_space<vmem>>, vector<4x32xbf16>
      %cst_23 = arith.constant dense<0.000000e+00> : vector<4x64xf32>
      %35 = tpu.matmul %34, %33, %cst_23 {dimension_numbers = #tpu.dot_dimension_numbers<[1], [0], [0], [1], [0, 0, 1, 1], [], []>} : vector<4x32xbf16>, vector<32x64xbf16>, vector<4x64xf32> -> vector<4x64xf32>
      %c0_24 = arith.constant 0 : index
      %c0_25 = arith.constant 0 : index
      %36 = vector.load %arg3[%c0_24, %c0_25] : memref<4x1xf32, #tpu.memory_space<vmem>>, vector<4x1xf32>
      %37 = vector.broadcast %36 : vector<4x1xf32> to vector<4x64xf32>
      %38 = arith.addf %35, %37 : vector<4x64xf32>
      %c0_26 = arith.constant 0 : index
      %c0_27 = arith.constant 0 : index
      %39 = vector.load %arg6[%c0_26, %c0_27] : memref<32x32xbf16, #tpu.memory_space<vmem>>, vector<32x32xbf16>
      %cst_28 = arith.constant dense<0.000000e+00> : vector<32x64xf32>
      %40 = tpu.matmul %39, %33, %cst_28 {dimension_numbers = #tpu.dot_dimension_numbers<[1], [0], [0], [1], [0, 0, 1, 1], [], []>} : vector<32x32xbf16>, vector<32x64xbf16>, vector<32x64xf32> -> vector<32x64xf32>
      %c0_29 = arith.constant 0 : index
      %c0_30 = arith.constant 0 : index
      %41 = vector.load %arg7[%c0_29, %c0_30] : memref<32x1xf32, #tpu.memory_space<vmem>>, vector<32x1xf32>
      %42 = vector.broadcast %41 : vector<32x1xf32> to vector<32x64xf32>
      %43 = arith.addf %40, %42 : vector<32x64xf32>
      %44 = arith.truncf %38 : vector<4x64xf32> to vector<4x64xbf16>
      %c0_31 = arith.constant 0 : index
      %c0_32 = arith.constant 0 : index
      %45 = vector.load %arg11[%c0_31, %c0_32] : memref<4x64xbf16, #tpu.memory_space<vmem>>, vector<4x64xbf16>
      tpu.vector_store %arg11[%c0_31, %c0_32], %44 {strides = array<i32>} : memref<4x64xbf16, #tpu.memory_space<vmem>>, vector<4x64xbf16>,
      %46 = arith.truncf %43 : vector<32x64xf32> to vector<32x64xbf16>
      %c0_33 = arith.constant 0 : index
      %c0_34 = arith.constant 0 : index
      %47 = vector.load %arg12[%c0_33, %c0_34] : memref<32x64xbf16, #tpu.memory_space<vmem>>, vector<32x64xbf16>
      tpu.vector_store %arg12[%c0_33, %c0_34], %46 {strides = array<i32>} : memref<32x64xbf16, #tpu.memory_space<vmem>>, vector<32x64xbf16>,
    } else {
    }
    %c0 = arith.constant 0 : index
    %c0_1 = arith.constant 0 : index
    %c0_2 = arith.constant 0 : index
    %3 = vector.load %arg9[%c0, %c0_1, %c0_2] : memref<1x32x64xf32, #tpu.memory_space<vmem>>, vector<1x32x64xf32>
    %4 = vector.shape_cast %3 : vector<1x32x64xf32> to vector<32x64xf32>
    %c0_3 = arith.constant 0 : index
    %c0_4 = arith.constant 0 : index
    %5 = vector.load %arg4[%c0_3, %c0_4] : memref<4x32xbf16, #tpu.memory_space<vmem>>, vector<4x32xbf16>
    %6 = arith.truncf %4 : vector<32x64xf32> to vector<32x64xbf16>
    %cst = arith.constant dense<0.000000e+00> : vector<4x64xf32>
    %7 = tpu.matmul %5, %6, %cst {dimension_numbers = #tpu.dot_dimension_numbers<[1], [0], [0], [1], [0, 0, 1, 1], [], []>} : vector<4x32xbf16>, vector<32x64xbf16>, vector<4x64xf32> -> vector<4x64xf32>
    %c0_5 = arith.constant 0 : index
    %c0_6 = arith.constant 0 : index
    %8 = vector.load %arg5[%c0_5, %c0_6] : memref<4x1xf32, #tpu.memory_space<vmem>>, vector<4x1xf32>
    %9 = vector.broadcast %8 : vector<4x1xf32> to vector<4x64xf32>
    %10 = arith.addf %7, %9 : vector<4x64xf32>
    %c0_7 = arith.constant 0 : index
    %c0_8 = arith.constant 0 : index
    %11 = vector.load %arg11[%c0_7, %c0_8] : memref<4x64xbf16, #tpu.memory_space<vmem>>, vector<4x64xbf16>
    %12 = arith.truncf %10 : vector<4x64xf32> to vector<4x64xbf16>
    %cst_9 = arith.constant dense<0.000000e+00> : vector<64x64xf32>
    %13 = tpu.matmul %11, %12, %cst_9 {dimension_numbers = #tpu.dot_dimension_numbers<[0], [0], [1], [1], [0, 1, 1, 1], [], []>} : vector<4x64xbf16>, vector<4x64xbf16>, vector<64x64xf32> -> vector<64x64xf32>
    %cst_10 = arith.constant dense<0xFF800000> : vector<64xf32>
    %14 = vector.multi_reduction <maximumf>, %13, %cst_10 [0] : vector<64x64xf32> to vector<64xf32>
    %15 = vector.shape_cast %14 : vector<64xf32> to vector<1x64xf32>
    %16 = vector.broadcast %15 : vector<1x64xf32> to vector<64x64xf32>
    %17 = arith.subf %13, %16 : vector<64x64xf32>
    %18 = math.exp %17 : vector<64x64xf32>
    %cst_11 = arith.constant dense<0.000000e+00> : vector<64xf32>
    %19 = vector.multi_reduction <add>, %18, %cst_11 [0] : vector<64x64xf32> to vector<64xf32>
    %20 = vector.shape_cast %19 : vector<64xf32> to vector<1x64xf32>
    %c0_12 = arith.constant 0 : index
    %c0_13 = arith.constant 0 : index
    %21 = vector.load %arg12[%c0_12, %c0_13] : memref<32x64xbf16, #tpu.memory_space<vmem>>, vector<32x64xbf16>
    %22 = arith.truncf %18 : vector<64x64xf32> to vector<64x64xbf16>
    %cst_14 = arith.constant dense<0.000000e+00> : vector<32x64xf32>
    %23 = tpu.matmul %21, %22, %cst_14 {dimension_numbers = #tpu.dot_dimension_numbers<[1], [0], [0], [1], [0, 0, 1, 1], [], []>} : vector<32x64xbf16>, vector<64x64xbf16>, vector<32x64xf32> -> vector<32x64xf32>
    %24 = tpu.reciprocal %20 {approx = true} : vector<1x64xf32> -> vector<1x64xf32>
    %25 = vector.broadcast %24 : vector<1x64xf32> to vector<32x64xf32>
    %26 = arith.mulf %23, %25 : vector<32x64xf32>
    %27 = arith.addf %4, %26 : vector<32x64xf32>
    %c0_15 = arith.constant 0 : index
    %c0_16 = arith.constant 0 : index
    %c0_17 = arith.constant 0 : index
    %28 = vector.load %arg10[%c0_15, %c0_16, %c0_17] : memref<1x32x64xf32, #tpu.memory_space<vmem>>, vector<1x32x64xf32>
    %29 = vector.shape_cast %28 : vector<1x32x64xf32> to vector<32x64xf32>
    %30 = vector.shape_cast %27 : vector<32x64xf32> to vector<1x32x64xf32>
    tpu.vector_store %arg10[%c0_15, %c0_16, %c0_17], %30 {strides = array<i32>} : memref<1x32x64xf32, #tpu.memory_space<vmem>>, vector<1x32x64xf32>,
    return
  }
  func.func @transform_0(%arg0: i32, %arg1: i32) -> (i32, i32) {
    %c0_i32 = arith.constant 0 : i32
    %c0_i32_0 = arith.constant 0 : i32
    %c0_i32_1 = arith.constant 0 : i32
    return %c0_i32, %c0_i32_0 : i32, i32
  }
  func.func @transform_1(%arg0: i32, %arg1: i32) -> (i32, i32) {
    %c0_i32 = arith.constant 0 : i32
    %c0_i32_0 = arith.constant 0 : i32
    %c0_i32_1 = arith.constant 0 : i32
    return %c0_i32, %c0_i32_0 : i32, i32
  }
  func.func @transform_2(%arg0: i32, %arg1: i32) -> (i32, i32) {
    %c0_i32 = arith.constant 0 : i32
    %c0_i32_0 = arith.constant 0 : i32
    %c0_i32_1 = arith.constant 0 : i32
    return %c0_i32, %c0_i32_0 : i32, i32
  }
  func.func @transform_3(%arg0: i32, %arg1: i32) -> (i32, i32) {
    %c0_i32 = arith.constant 0 : i32
    %c0_i32_0 = arith.constant 0 : i32
    %c0_i32_1 = arith.constant 0 : i32
    return %c0_i32, %c0_i32_0 : i32, i32
  }
  func.func @transform_4(%arg0: i32, %arg1: i32) -> (i32, i32) {
    %c0_i32 = arith.constant 0 : i32
    %c0_i32_0 = arith.constant 0 : i32
    %c0_i32_1 = arith.constant 0 : i32
    return %c0_i32, %c0_i32_0 : i32, i32
  }
  func.func @transform_5(%arg0: i32, %arg1: i32) -> (i32, i32) {
    %c0_i32 = arith.constant 0 : i32
    %c0_i32_0 = arith.constant 0 : i32
    %c0_i32_1 = arith.constant 0 : i32
    return %c0_i32, %c0_i32_0 : i32, i32
  }
  func.func @transform_6(%arg0: i32, %arg1: i32) -> (i32, i32, i32) {
    %c0_i32 = arith.constant 0 : i32
    %c0_i32_0 = arith.constant 0 : i32
    %c0_i32_1 = arith.constant 0 : i32
    return %arg0, %c0_i32, %c0_i32_0 : i32, i32, i32
  }
  func.func @transform_7(%arg0: i32, %arg1: i32) -> (i32, i32, i32) {
    %c0_i32 = arith.constant 0 : i32
    %c0_i32_0 = arith.constant 0 : i32
    return %arg0, %c0_i32, %arg1 : i32, i32, i32
  }
  func.func @transform_8(%arg0: i32, %arg1: i32) -> (i32, i32, i32) {
    %c0_i32 = arith.constant 0 : i32
    %c0_i32_0 = arith.constant 0 : i32
    return %arg0, %c0_i32, %arg1 : i32, i32, i32
  }
}

</mosaic_0001>

<llo_original>
// kernel: tpu_custom_call.1
$region0: #{tpu_custom_call.1}
  #allocation0 [shape = 'u32[]', space=smem, size = 0x4, offset = 0x4, fixed_abs, tag = 'smem constant byte address 0x4 - core index']
  #allocation1 [shape = 'u32[144,128]{1,0:T(1,128)}', space=vmem, size = 0x12000, scoped, tag = 'internal scratch']
  #allocation2 [shape = 'bf16[4,64]{1,0:T(4,128)(2,1)}', space=vmem, size = 0x400, scoped, tag = 'scratch operand']
  #allocation3 [shape = 'bf16[32,64]{1,0:T(16,128)(2,1)}', space=vmem, size = 0x2000, scoped, tag = 'scratch operand']
  %s0 = inlined_call_operand.hbm [shape: bf16[4,32], index: 0, kind: input, shape index: {}]
  %s1 = inlined_call_operand.vmem [shape: f32[4,1], index: 1, kind: input, shape index: {}]
  %s2 = inlined_call_operand.hbm [shape: bf16[4,32], index: 2, kind: input, shape index: {}]
  %s3 = inlined_call_operand.vmem [shape: f32[4,1], index: 3, kind: input, shape index: {}]
  %s4 = inlined_call_operand.hbm [shape: bf16[32,32], index: 4, kind: input, shape index: {}]
  %s5 = inlined_call_operand.vmem [shape: f32[32,1], index: 5, kind: input, shape index: {}]
  %s6 = inlined_call_operand.vmem [shape: f32[2,32,64], index: 6, kind: input, shape index: {}]
  %s7 = inlined_call_operand.hbm [shape: f32[2,32,64], index: 7, kind: input, shape index: {}]
  %s8 = inlined_call_operand.hbm [shape: f32[2,32,64], index: 8, kind: output, shape index: {}]
  %s9 = sld [smem:[#allocation0]]
  $region85: #{tpu_custom_call.1} parent=0
    _
  %s11 = ssub.s32 1, %s9
  %s12 = scalar_select 0, %s11, %s9
  $region1: #{tpu_custom_call.1} parent=0
    #allocation4 [shape = 'u8[1024]{0}', space=vmem, size = 0x400, scoped, tag = 'input window, operand 0, single buffered']
    #allocation5 [shape = 's32[2]{0}', space=sflag, size = 0x8, scoped, tag = 'scoped memory for tpu_custom_call.1']
    #allocation6 [shape = 's32[2]{0}', space=sflag, size = 0x8, scoped, tag = 'scoped memory for tpu_custom_call.1']
    #allocation7 [shape = 'u8[1024]{0}', space=vmem, size = 0x400, scoped, tag = 'input window, operand 2, single buffered']
    #allocation8 [shape = 's32[1]{0}', space=sflag, size = 0x4, scoped, tag = 'scoped memory for tpu_custom_call.1']
    #allocation9 [shape = 'u8[8192]{0}', space=vmem, size = 0x2000, scoped, tag = 'input window, operand 4, single buffered']
    #allocation10 [shape = 'u8[32768]{0}', space=vmem, size = 0x8000, scoped, tag = 'input window, operand 7']
    #allocation11 [shape = 's32[2]{0}', space=sflag, size = 0x8, scoped, tag = 'scoped memory for tpu_custom_call.1']
    #allocation12 [shape = 'u8[32768]{0}', space=vmem, size = 0x8000, scoped, tag = 'output window, operand 0']
    %13 = vsyncpa [#allocation5], 0
    %14 = vsyncpa [#allocation8], 0
    %15 = vsyncpa [#allocation11], 0
    %s16 = scalar_lea.sflag [#allocation11], 1
    %17 = vsyncpa %s16, 0
    %18 = vsyncpa [#allocation6], 0
    %s19 = scalar_lea.sflag [#allocation6], 1
    %20 = vsyncpa %s19, 0
    loop: start=0, step=1, limit=4
    $region2: #{tpu_custom_call.1} parent=1 // loop_pre_header
      _
    $region3: #{tpu_custom_call.1} parent=1 // loop_header
      %s22 = sphi 0, %s26
      %p23 = scmp.ge.s32.totalorder %s22, 4
      %s29 = sphi 0, %s41
      %s30 = sphi 0, %s37
      %s31 = sphi 0, %s29
      %s32 = sphi 0, %s30
      %s33 = sphi 0, %s31
      %s34 = sphi 0, %s32
      %s42 = sphi 0, %s42
      %s44 = sphi 0, %s42
      %s45 = sphi 0, %s44
      %s59 = sphi 0, %s45
      %s63 = sphi 0, %s63
      %s65 = sphi 0, %s63
      %s66 = sphi 0, %s65
      %s80 = sphi 0, %s66
      %s84 = sphi 0, %s84
      %s86 = sphi 0, %s84
      %s87 = sphi 0, %s86
      %s101 = sphi 0, %s87
      %s105 = sphi 0, %s105
      %s107 = sphi 0, %s105
      %s108 = sphi 0, %s107
      %s122 = sphi 0, %s108
      %s126 = sphi 0, %s126
      %s128 = sphi 0, %s126
      %s129 = sphi 0, %s128
      %s143 = sphi 0, %s129
      %s147 = sphi 0, %s147
      %s149 = sphi 0, %s147
      %s150 = sphi 0, %s149
      %s164 = sphi 0, %s150
      %s170 = sphi 0, %s172
      %s173 = sphi 0, %s170
      %s174 = sphi 0, %s173
      %s190 = sphi 0, %s174
      %s198 = sphi 0, %s200
      %s201 = sphi 0, %s198
      %s202 = sphi 0, %s201
      %s218 = sphi 0, %s202
      %s226 = sphi 0, %s228
      %s229 = sphi 0, %s226
      %s230 = sphi 0, %s229
      %s246 = sphi 0, %s230
    $region4: #{tpu_custom_call.1} parent=1 // loop_header_branch
      %25 = sbr.rel (%p23) target = $region8
    $region5: #{tpu_custom_call.1} parent=1 // loop_body
      %s27 = ssub.s32 %s22, 1
      %s28 = ssub.s32 %s22, 2
      %s35 = sadd.s32 1, %s30
      %p36 = scmp.ge.s32.totalorder %s35, 1
      %s37 = scalar_select %p36, 0, %s35
      %s38 = sadd.s32 1, %s29
      %s39 = scalar_select %p36, %s38, %s29
      %p40 = scmp.ge.s32.totalorder %s39, 2
      %s41 = scalar_select %p40, 0, %s39
      %s43 = sadd.s32 %s42, 1
      %p46 = scmp.eq.s32.totalorder %s22, 1
      %p47 = scmp.ne.s32.totalorder %s42, %s44
      %p48 = scmp.eq.s32.totalorder %s22, 0
      %p49 = por %p47, %p48
      %p50 = scmp.ne.s32.totalorder %s42, %s44
      %p51 = scmp.eq.s32.totalorder %s27, 1
      %p52 = por %p50, %p51
      %p53 = scmp.ne.s32.totalorder %s44, %s45
      %p54 = scmp.eq.s32.totalorder %s27, 0
      %p55 = por %p53, %p54
      %p56 = scmp.ne.s32.totalorder %s44, %s45
      %p57 = scmp.eq.s32.totalorder %s28, 1
      %p58 = por %p56, %p57
      %p60 = scmp.ne.s32.totalorder %s45, %s59
      %p61 = scmp.eq.s32.totalorder %s28, 0
      %p62 = por %p60, %p61
      %s64 = sadd.s32 %s63, 1
      %p67 = scmp.eq.s32.totalorder %s22, 1
      %p68 = scmp.ne.s32.totalorder %s63, %s65
      %p69 = scmp.eq.s32.totalorder %s22, 0
      %p70 = por %p68, %p69
      %p71 = scmp.ne.s32.totalorder %s63, %s65
      %p72 = scmp.eq.s32.totalorder %s27, 1
      %p73 = por %p71, %p72
      %p74 = scmp.ne.s32.totalorder %s65, %s66
      %p75 = scmp.eq.s32.totalorder %s27, 0
      %p76 = por %p74, %p75
      %p77 = scmp.ne.s32.totalorder %s65, %s66
      %p78 = scmp.eq.s32.totalorder %s28, 1
      %p79 = por %p77, %p78
      %p81 = scmp.ne.s32.totalorder %s66, %s80
      %p82 = scmp.eq.s32.totalorder %s28, 0
      %p83 = por %p81, %p82
      %s85 = sadd.s32 %s84, 1
      %p88 = scmp.eq.s32.totalorder %s22, 1
      %p89 = scmp.ne.s32.totalorder %s84, %s86
      %p90 = scmp.eq.s32.totalorder %s22, 0
      %p91 = por %p89, %p90
      %p92 = scmp.ne.s32.totalorder %s84, %s86
      %p93 = scmp.eq.s32.totalorder %s27, 1
      %p94 = por %p92, %p93
      %p95 = scmp.ne.s32.totalorder %s86, %s87
      %p96 = scmp.eq.s32.totalorder %s27, 0
      %p97 = por %p95, %p96
      %p98 = scmp.ne.s32.totalorder %s86, %s87
      %p99 = scmp.eq.s32.totalorder %s28, 1
      %p100 = por %p98, %p99
      %p102 = scmp.ne.s32.totalorder %s87, %s101
      %p103 = scmp.eq.s32.totalorder %s28, 0
      %p104 = por %p102, %p103
      %s106 = sadd.s32 %s105, 1
      %p109 = scmp.eq.s32.totalorder %s22, 1
      %p110 = scmp.ne.s32.totalorder %s105, %s107
      %p111 = scmp.eq.s32.totalorder %s22, 0
      %p112 = por %p110, %p111
      %p113 = scmp.ne.s32.totalorder %s105, %s107
      %p114 = scmp.eq.s32.totalorder %s27, 1
      %p115 = por %p113, %p114
      %p116 = scmp.ne.s32.totalorder %s107, %s108
      %p117 = scmp.eq.s32.totalorder %s27, 0
      %p118 = por %p116, %p117
      %p119 = scmp.ne.s32.totalorder %s107, %s108
      %p120 = scmp.eq.s32.totalorder %s28, 1
      %p121 = por %p119, %p120
      %p123 = scmp.ne.s32.totalorder %s108, %s122
      %p124 = scmp.eq.s32.totalorder %s28, 0
      %p125 = por %p123, %p124
      %s127 = sadd.s32 %s126, 1
      %p130 = scmp.eq.s32.totalorder %s22, 1
      %p131 = scmp.ne.s32.totalorder %s126, %s128
      %p132 = scmp.eq.s32.totalorder %s22, 0
      %p133 = por %p131, %p132
      %p134 = scmp.ne.s32.totalorder %s126, %s128
      %p135 = scmp.eq.s32.totalorder %s27, 1
      %p136 = por %p134, %p135
      %p137 = scmp.ne.s32.totalorder %s128, %s129
      %p138 = scmp.eq.s32.totalorder %s27, 0
      %p139 = por %p137, %p138
      %p140 = scmp.ne.s32.totalorder %s128, %s129
      %p141 = scmp.eq.s32.totalorder %s28, 1
      %p142 = por %p140, %p141
      %p144 = scmp.ne.s32.totalorder %s129, %s143
      %p145 = scmp.eq.s32.totalorder %s28, 0
      %p146 = por %p144, %p145
      %s148 = sadd.s32 %s147, 1
      %p151 = scmp.eq.s32.totalorder %s22, 1
      %p152 = scmp.ne.s32.totalorder %s147, %s149
      %p153 = scmp.eq.s32.totalorder %s22, 0
      %p154 = por %p152, %p153
      %p155 = scmp.ne.s32.totalorder %s147, %s149
      %p156 = scmp.eq.s32.totalorder %s27, 1
      %p157 = por %p155, %p156
      %p158 = scmp.ne.s32.totalorder %s149, %s150
      %p159 = scmp.eq.s32.totalorder %s27, 0
      %p160 = por %p158, %p159
      %p161 = scmp.ne.s32.totalorder %s149, %s150
      %p162 = scmp.eq.s32.totalorder %s28, 1
      %p163 = por %p161, %p162
      %p165 = scmp.ne.s32.totalorder %s150, %s164
      %p166 = scmp.eq.s32.totalorder %s28, 0
      %p167 = por %p165, %p166
      %s168 = ssub.s32 %s29, %s41
      %p169 = scmp.eq.s32.totalorder %s168, 0
      %s171 = sadd.s32 %s170, 1
      %s172 = scalar_select %p169, %s170, %s171
      %p175 = pneg %p169
      %p176 = scmp.eq.s32.totalorder %s22, 1
      %p177 = por %p175, %p176
      %p178 = scmp.ne.s32.totalorder %s170, %s173
      %p179 = scmp.eq.s32.totalorder %s22, 0
      %p180 = por %p178, %p179
      %p181 = scmp.ne.s32.totalorder %s170, %s173
      %p182 = scmp.eq.s32.totalorder %s27, 1
      %p183 = por %p181, %p182
      %p184 = scmp.ne.s32.totalorder %s173, %s174
      %p185 = scmp.eq.s32.totalorder %s27, 0
      %p186 = por %p184, %p185
      %p187 = scmp.ne.s32.totalorder %s173, %s174
      %p188 = scmp.eq.s32.totalorder %s28, 1
      %p189 = por %p187, %p188
      %p191 = scmp.ne.s32.totalorder %s174, %s190
      %p192 = scmp.eq.s32.totalorder %s28, 0
      %p193 = por %p191, %p192
      %s194 = ssub.s32 %s29, %s41
      %s195 = ssub.s32 %s30, %s37
      %s196 = sor.u32 %s194, %s195
      %p197 = scmp.eq.s32.totalorder %s196, 0
      %s199 = sadd.s32 %s198, 1
      %s200 = scalar_select %p197, %s198, %s199
      %p203 = pneg %p197
      %p204 = scmp.eq.s32.totalorder %s22, 1
      %p205 = por %p203, %p204
      %p206 = scmp.ne.s32.totalorder %s198, %s201
      %p207 = scmp.eq.s32.totalorder %s22, 0
      %p208 = por %p206, %p207
      %p209 = scmp.ne.s32.totalorder %s198, %s201
      %p210 = scmp.eq.s32.totalorder %s27, 1
      %p211 = por %p209, %p210
      %p212 = scmp.ne.s32.totalorder %s201, %s202
      %p213 = scmp.eq.s32.totalorder %s27, 0
      %p214 = por %p212, %p213
      %p215 = scmp.ne.s32.totalorder %s201, %s202
      %p216 = scmp.eq.s32.totalorder %s28, 1
      %p217 = por %p215, %p216
      %p219 = scmp.ne.s32.totalorder %s202, %s218
      %p220 = scmp.eq.s32.totalorder %s28, 0
      %p221 = por %p219, %p220
      %s222 = ssub.s32 %s29, %s41
      %s223 = ssub.s32 %s30, %s37
      %s224 = sor.u32 %s222, %s223
      %p225 = scmp.eq.s32.totalorder %s224, 0
      %s227 = sadd.s32 %s226, 1
      %s228 = scalar_select %p225, %s226, %s227
      %p231 = pneg %p225
      %p232 = scmp.eq.s32.totalorder %s22, 1
      %p233 = por %p231, %p232
      %p234 = scmp.ne.s32.totalorder %s226, %s229
      %p235 = scmp.eq.s32.totalorder %s22, 0
      %p236 = por %p234, %p235
      %p237 = scmp.ne.s32.totalorder %s226, %s229
      %p238 = scmp.eq.s32.totalorder %s27, 1
      %p239 = por %p237, %p238
      %p240 = scmp.ne.s32.totalorder %s229, %s230
      %p241 = scmp.eq.s32.totalorder %s27, 0
      %p242 = por %p240, %p241
      %p243 = scmp.ne.s32.totalorder %s229, %s230
      %p244 = scmp.eq.s32.totalorder %s28, 1
      %p245 = por %p243, %p244
      %p247 = scmp.ne.s32.totalorder %s230, %s246
      %p248 = scmp.eq.s32.totalorder %s28, 0
      %p249 = por %p247, %p248
      %p250 = scmp.le.s32.totalorder 1, %s22
      %p251 = scmp.lt.s32.totalorder %s22, 3
      %p252 = pnand %p250, %p251
      %p253 = pneg %p252
      // Predicated region
      $region9: #{tpu_custom_call.1} parent=5 // pred_check
        _
      $region10: #{tpu_custom_call.1} parent=5 // pred_check_branch
        %255 = sbr.rel (%p252) target = $region12
      $region11: #{tpu_custom_call.1} parent=5 // pred_region
        %s256 = ssub.s32 %s22, 1
        // Predicated region
        $region13: #{tpu_custom_call.1} parent=11 // pred_check
          %p257 = pneg %p55
        $region14: #{tpu_custom_call.1} parent=11 // pred_check_branch
          %259 = sbr.rel (%p257) target = $region16
        $region15: #{tpu_custom_call.1} parent=11 // pred_region
          %s261 = ssub.s32 32, 32
          %262 = vsyncadd [#allocation5], %s261
          %s264 = sshll.u32 [#allocation4], 4
          %s265 = int_to_ptr.vmem [resolvable:$true] %s264
          %267 = dma.hbm_to_vmem [thread:$0]  %s0, 32, %s265, [#allocation5]
        $region16: #{tpu_custom_call.1} parent=11 // pred_fallthru
          _
        // Predicated region
        $region17: #{tpu_custom_call.1} parent=11 // pred_check
          %p268 = pneg %p76
        $region18: #{tpu_custom_call.1} parent=11 // pred_check_branch
          %270 = sbr.rel (%p268) target = $region20
        $region19: #{tpu_custom_call.1} parent=11 // pred_region
          _
        $region20: #{tpu_custom_call.1} parent=11 // pred_fallthru
          _
        // Predicated region
        $region21: #{tpu_custom_call.1} parent=11 // pred_check
          %p271 = pneg %p97
        $region22: #{tpu_custom_call.1} parent=11 // pred_check_branch
          %273 = sbr.rel (%p271) target = $region24
        $region23: #{tpu_custom_call.1} parent=11 // pred_region
          %s275 = ssub.s32 32, 32
          %276 = vsyncadd [#allocation8], %s275
          %s278 = sshll.u32 [#allocation7], 4
          %s279 = int_to_ptr.vmem [resolvable:$true] %s278
          %281 = dma.hbm_to_vmem [thread:$0]  %s2, 32, %s279, [#allocation8]
        $region24: #{tpu_custom_call.1} parent=11 // pred_fallthru
          _
        // Predicated region
        $region25: #{tpu_custom_call.1} parent=11 // pred_check
          %p282 = pneg %p118
        $region26: #{tpu_custom_call.1} parent=11 // pred_check_branch
          %284 = sbr.rel (%p282) target = $region28
        $region27: #{tpu_custom_call.1} parent=11 // pred_region
          _
        $region28: #{tpu_custom_call.1} parent=11 // pred_fallthru
          _
        // Predicated region
        $region29: #{tpu_custom_call.1} parent=11 // pred_check
          %p285 = pneg %p139
        $region30: #{tpu_custom_call.1} parent=11 // pred_check_branch
          %287 = sbr.rel (%p285) target = $region32
        $region31: #{tpu_custom_call.1} parent=11 // pred_region
          %s289 = ssub.s32 256, 256
          %290 = vsyncadd [#allocation8], %s289
          %s291 = sshll.u32 [#allocation9], 4
          %s292 = int_to_ptr.vmem [resolvable:$true] %s291
          %297 = dma.hbm_to_vmem [thread:$0]  %s4, 256, %s292, [#allocation8], 64, 64, 4
        $region32: #{tpu_custom_call.1} parent=11 // pred_fallthru
          _
        // Predicated region
        $region33: #{tpu_custom_call.1} parent=11 // pred_check
          %p298 = pneg %p160
        $region34: #{tpu_custom_call.1} parent=11 // pred_check_branch
          %300 = sbr.rel (%p298) target = $region36
        $region35: #{tpu_custom_call.1} parent=11 // pred_region
          _
        $region36: #{tpu_custom_call.1} parent=11 // pred_fallthru
          _
      $region12: #{tpu_custom_call.1} parent=5 // pred_fallthru
        _
      %p301 = scmp.lt.s32.totalorder %s22, 2
      // Predicated region
      $region37: #{tpu_custom_call.1} parent=5 // pred_check
        %p302 = pneg %p301
      $region38: #{tpu_custom_call.1} parent=5 // pred_check_branch
        %304 = sbr.rel (%p302) target = $region40
      $region39: #{tpu_custom_call.1} parent=5 // pred_region
        // Predicated region
        $region41: #{tpu_custom_call.1} parent=39 // pred_check
          %p305 = pneg %p180
        $region42: #{tpu_custom_call.1} parent=39 // pred_check_branch
          %307 = sbr.rel (%p305) target = $region44
        $region43: #{tpu_custom_call.1} parent=39 // pred_region
          %p308 = scmp.lt.s32.totalorder %s29, 1
          %s309 = scalar_select %p308, %s29, 1
          %s310 = smul.addr %s309, 4
          %s311 = smul.addr %s310, 8
          %s312 = scalar_lea.vmem %s6, %s311
        $region44: #{tpu_custom_call.1} parent=39 // pred_fallthru
          _
        // Predicated region
        $region45: #{tpu_custom_call.1} parent=39 // pred_check
          %p313 = pneg %p208
        $region46: #{tpu_custom_call.1} parent=39 // pred_check_branch
          %315 = sbr.rel (%p313) target = $region48
        $region47: #{tpu_custom_call.1} parent=39 // pred_region
          %s316 = sand.u32 %s198, 1
          %s317 = scalar_lea.sflag [#allocation11], %s316
          %s318 = sand.u32 %s198, 1
          %s319 = smul.addr %s318, 32
          %s320 = scalar_lea.vmem [#allocation10], %s319
          %s322 = ssub.s32 512, 512
          %323 = vsyncadd %s317, %s322
          %s324 = smul.addr %s29, 4
          %s325 = sadd.s32 %s30, %s324
          %s326 = smul.addr %s325, 128
          %s327 = scalar_lea.hbm %s7, %s326
          %s328 = sshll.u32 %s320, 4
          %s329 = int_to_ptr.vmem [resolvable:$true] %s328
          %334 = dma.hbm_to_vmem [thread:$0]  %s327, 512, %s329, %s317, 128, 128, 8
        $region48: #{tpu_custom_call.1} parent=39 // pred_fallthru
          _
      $region40: #{tpu_custom_call.1} parent=5 // pred_fallthru
        _
      %p335 = scmp.le.s32.totalorder 1, %s22
      %p336 = scmp.lt.s32.totalorder %s22, 3
      %p337 = pnand %p335, %p336
      %p338 = pneg %p337
      // Predicated region
      $region49: #{tpu_custom_call.1} parent=5 // pred_check
        _
      $region50: #{tpu_custom_call.1} parent=5 // pred_check_branch
        %340 = sbr.rel (%p337) target = $region52
      $region51: #{tpu_custom_call.1} parent=5 // pred_region
        %s341 = ssub.s32 %s22, 1
        // Predicated region
        $region53: #{tpu_custom_call.1} parent=51 // pred_check
          %p342 = pneg %p55
        $region54: #{tpu_custom_call.1} parent=51 // pred_check_branch
          %344 = sbr.rel (%p342) target = $region56
        $region55: #{tpu_custom_call.1} parent=51 // pred_region
          %345 = dma.done [#allocation5], 32
        $region56: #{tpu_custom_call.1} parent=51 // pred_fallthru
          _
        // Predicated region
        $region57: #{tpu_custom_call.1} parent=51 // pred_check
          %p346 = pneg %p97
        $region58: #{tpu_custom_call.1} parent=51 // pred_check_branch
          %348 = sbr.rel (%p346) target = $region60
        $region59: #{tpu_custom_call.1} parent=51 // pred_region
          %349 = dma.done [#allocation8], 32
        $region60: #{tpu_custom_call.1} parent=51 // pred_fallthru
          _
        // Predicated region
        $region61: #{tpu_custom_call.1} parent=51 // pred_check
          %p350 = pneg %p139
        $region62: #{tpu_custom_call.1} parent=51 // pred_check_branch
          %352 = sbr.rel (%p350) target = $region64
        $region63: #{tpu_custom_call.1} parent=51 // pred_region
          %353 = dma.done [#allocation8], 256
        $region64: #{tpu_custom_call.1} parent=51 // pred_fallthru
          _
        %s354 = sand.u32 %s201, 1
        %s355 = scalar_lea.sflag [#allocation11], %s354
        %s356 = sand.u32 %s201, 1
        %s357 = smul.addr %s356, 32
        %s358 = scalar_lea.vmem [#allocation10], %s357
        // Predicated region
        $region65: #{tpu_custom_call.1} parent=51 // pred_check
          %p359 = pneg %p214
        $region66: #{tpu_custom_call.1} parent=51 // pred_check_branch
          %361 = sbr.rel (%p359) target = $region68
        $region67: #{tpu_custom_call.1} parent=51 // pred_region
          %362 = dma.done %s355, 512
        $region68: #{tpu_custom_call.1} parent=51 // pred_fallthru
          _
        %p363 = pneg %p55
        %p364 = pneg %p52
        %p365 = pneg %p76
        %p366 = pneg %p73
        %p367 = pneg %p97
        %p368 = pneg %p94
        %p369 = pneg %p118
        %p370 = pneg %p115
        %p371 = pneg %p139
        %p372 = pneg %p136
        %p373 = pneg %p160
        %p374 = pneg %p157
        %p375 = scmp.lt.s32.totalorder %s31, 1
        %s376 = scalar_select %p375, %s31, 1
        %s377 = smul.addr %s376, 4
        %s378 = smul.addr %s377, 8
        %s379 = scalar_lea.vmem %s6, %s378
        %p380 = pneg %p186
        %p381 = pneg %p183
        %s382 = sand.u32 %s201, 1
        %s383 = scalar_lea.sflag [#allocation11], %s382
        %s384 = sand.u32 %s201, 1
        %s385 = smul.addr %s384, 32
        %s386 = scalar_lea.vmem [#allocation10], %s385
        %p387 = pneg %p214
        %p388 = pneg %p211
        %p389 = pneg %p242
        %p390 = pneg %p239
        %s391 = sand.u32 %s229, 1
        %s392 = scalar_lea.sflag [#allocation6], %s391
        %s393 = sand.u32 %s229, 1
        %s394 = smul.addr %s393, 32
        %s395 = scalar_lea.vmem [#allocation12], %s394
        %p396 = scmp.lt.s32.totalorder %s31, 1
        %s397 = scalar_select %p396, %s31, 1
        %s398 = smul.addr %s397, 4
        %s399 = smul.addr %s398, 8
        %s400 = scalar_lea.vmem %s6, %s399
        %p402 = scmp.eq.s32.totalorder %s32, 0
        // Predicated region
        $region69: #{tpu_custom_call.1} parent=51 // pred_check
          %p403 = pneg %p402
        $region70: #{tpu_custom_call.1} parent=51 // pred_check_branch
          %405 = sbr.rel (%p403) target = $region72
        $region71: #{tpu_custom_call.1} parent=51 // pred_region
          %v406 = vld [vmem:[%s400] sm:$0xff]
          %v407 = vld [vmem:[%s400 + $0x8] sm:$0xff]
          %v408 = vld [vmem:[%s400 + $0x10] sm:$0xff]
          %v409 = vld [vmem:[%s400 + $0x18] sm:$0xff]
          %v410 = vpack.c.bf16 %v407, %v406
          %v411 = vpack.c.bf16 %v409, %v408
          %v412 = vld [vmem:[#allocation4] sm:$0x3]
          %v413 = vld [vmem:[%s1] sm:$0xf]
          %415 = vset.pattern.permute.xlu0 0
          %416 = vperm.xlu0 %415, %v413
          %v417 = vpop.permute.xlu0 %416
          %vm419 = vcmask 261120
          %v421 = vsel %vm419, %v412, 0
          %423 = vmatprep.subr.bf16.mxu0 0
          %424 = vmatpush1.bf16.msra.mxu0 %v410
          %425 = vmatprep.subr.bf16.mxu0 0
          %426 = vmatpush1.bf16.msra.mxu0 %v411
          %427 = vmatprep.subr.bf16.mxu0 0
          %428 = vmatpush1.bf16.msra.mxu0 0
          %429 = vmatprep.subr.bf16.mxu0 0
          %430 = vmatpush1.bf16.msra.mxu0 0
          %431 = vmatprep.subr.bf16.mxu0 0
          %432 = vmatpush1.bf16.msra.mxu0 0
          %433 = vmatprep.subr.bf16.mxu0 0
          %434 = vmatpush1.bf16.msra.mxu0 0
          %435 = vmatprep.subr.bf16.mxu0 0
          %436 = vmatpush1.bf16.msra.mxu0 0
          %437 = vmatprep.subr.bf16.mxu0 0
          %438 = vmatpush1.bf16.msra.mxu0 0
          %439 = vmatprep.subr.bf16.mxu0 0
          %440 = vmatpush1.bf16.msra.mxu0 0
          %441 = vmatprep.subr.bf16.mxu0 0
          %442 = vmatpush1.bf16.msra.mxu0 0
          %443 = vmatprep.subr.bf16.mxu0 0
          %444 = vmatpush1.bf16.msra.mxu0 0
          %445 = vmatprep.subr.bf16.mxu0 0
          %446 = vmatpush1.bf16.msra.mxu0 0
          %447 = vmatprep.subr.bf16.mxu0 0
          %448 = vmatpush1.bf16.msra.mxu0 0
          %449 = vmatprep.subr.bf16.mxu0 0
          %450 = vmatpush1.bf16.msra.mxu0 0
          %451 = vmatprep.subr.bf16.mxu0 0
          %452 = vmatpush1.bf16.msra.mxu0 0
          %453 = vmatprep.subr.bf16.mxu0 0
          %454 = vmatpush1.bf16.msra.mxu0 0
          %455 = vmatprep.mubr.bf16.mxu0 0
          %456 = vmatmul.mubr.bf16.gmra.mrb[0].mxu0 %v421
          %v457 = vpop.f32.mrb[0].mxu0
          %v458 = vadd.f32 %v417, %v457
          %v459 = vpop.f32.mrb[0].mxu0
          %v460 = vpop.f32.mrb[0].mxu0
          %v461 = vpop.f32.mrb[0].mxu0
          %462 = vdwg.mxu0
          %v463 = vld [vmem:[#allocation9] sm:$0xf]
          %v464 = vld [vmem:[#allocation9 + $0x4] sm:$0xf]
          %v465 = vld [vmem:[#allocation9 + $0x8] sm:$0xf]
          %v466 = vld [vmem:[#allocation9 + $0xc] sm:$0xf]
          %v467 = vld [vmem:[%s5] sm:$0xff]
          %v468 = vld [vmem:[%s5 + $0x8] sm:$0xff]
          %v469 = vld [vmem:[%s5 + $0x10] sm:$0xff]
          %v470 = vld [vmem:[%s5 + $0x18] sm:$0xff]
          %472 = vset.pattern.permute.xlu0 0
          %473 = vperm.xlu0 %472, %v467
          %v474 = vpop.permute.xlu0 %473
          %477 = vset.pattern.permute.xlu0 0
          %478 = vperm.xlu0 %477, %v468
          %v479 = vpop.permute.xlu0 %478
          %482 = vset.pattern.permute.xlu0 0
          %483 = vperm.xlu0 %482, %v469
          %v484 = vpop.permute.xlu0 %483
          %487 = vset.pattern.permute.xlu0 0
          %488 = vperm.xlu0 %487, %v470
          %v489 = vpop.permute.xlu0 %488
          %v495 = vunpack.c.l.b16 %v463
          %v496 = vunpack.c.l.b16 %v464
          %v497 = vunpack.c.l.b16 %v465
          %v498 = vunpack.c.l.b16 %v466
          %v499 = vpack.c.b16 %v496, %v495
          %v500 = vpack.c.b16 %v498, %v497
          %v502 = vsel %vm419, %v499, 0
          %v505 = vsel %vm419, %v500, 0
          %507 = vmatprep.subr.bf16.mxu0 0
          %508 = vmatpush1.bf16.msra.mxu0 %v410
          %509 = vmatprep.subr.bf16.mxu0 0
          %510 = vmatpush1.bf16.msra.mxu0 %v411
          %511 = vmatprep.subr.bf16.mxu0 0
          %512 = vmatpush1.bf16.msra.mxu0 0
          %513 = vmatprep.subr.bf16.mxu0 0
          %514 = vmatpush1.bf16.msra.mxu0 0
          %515 = vmatprep.subr.bf16.mxu0 0
          %516 = vmatpush1.bf16.msra.mxu0 0
          %517 = vmatprep.subr.bf16.mxu0 0
          %518 = vmatpush1.bf16.msra.mxu0 0
          %519 = vmatprep.subr.bf16.mxu0 0
          %520 = vmatpush1.bf16.msra.mxu0 0
          %521 = vmatprep.subr.bf16.mxu0 0
          %522 = vmatpush1.bf16.msra.mxu0 0
          %523 = vmatprep.subr.bf16.mxu0 0
          %524 = vmatpush1.bf16.msra.mxu0 0
          %525 = vmatprep.subr.bf16.mxu0 0
          %526 = vmatpush1.bf16.msra.mxu0 0
          %527 = vmatprep.subr.bf16.mxu0 0
          %528 = vmatpush1.bf16.msra.mxu0 0
          %529 = vmatprep.subr.bf16.mxu0 0
          %530 = vmatpush1.bf16.msra.mxu0 0
          %531 = vmatprep.subr.bf16.mxu0 0
          %532 = vmatpush1.bf16.msra.mxu0 0
          %533 = vmatprep.subr.bf16.mxu0 0
          %534 = vmatpush1.bf16.msra.mxu0 0
          %535 = vmatprep.subr.bf16.mxu0 0
          %536 = vmatpush1.bf16.msra.mxu0 0
          %537 = vmatprep.subr.bf16.mxu0 0
          %538 = vmatpush1.bf16.msra.mxu0 0
          %539 = vmatprep.mubr.bf16.mxu0 0
          %540 = vmatmul.mubr.bf16.gmra.mrb[0].mxu0 %v502
          %v541 = vpop.f32.mrb[0].mxu0
          %v542 = vadd.f32 %v474, %v541
          %v543 = vpop.f32.mrb[0].mxu0
          %v544 = vpop.f32.mrb[0].mxu0
          %v545 = vadd.f32 %v479, %v544
          %v546 = vpop.f32.mrb[0].mxu0
          %547 = vmatprep.mubr.bf16.mxu0 0
          %548 = vmatmul.mubr.bf16.gmra.mrb[0].mxu0 %v505
          %v549 = vpop.f32.mrb[0].mxu0
          %v550 = vadd.f32 %v484, %v549
          %v551 = vpop.f32.mrb[0].mxu0
          %v552 = vpop.f32.mrb[0].mxu0
          %v553 = vadd.f32 %v489, %v552
          %v554 = vpop.f32.mrb[0].mxu0
          %555 = vdwg.mxu0
          %v556 = vpack.c.bf16 %v458, %v458
          %vm557 = vcmask 517120
          %558 = vst.msk [vmem:[#allocation2] sm:$0x3] %vm557, %v556
          %v559 = vpack.c.bf16 %v545, %v542
          %v560 = vpack.c.bf16 %v553, %v550
          %vm561 = vcmask 523264
          %562 = vst.msk [vmem:[#allocation3] sm:$0xff] %vm561, %v559
          %563 = vst.msk [vmem:[#allocation3 + $0x8] sm:$0xff] %vm561, %v560
        $region72: #{tpu_custom_call.1} parent=51 // pred_fallthru
          _
        %v564 = vld [vmem:[%s358] sm:$0xff]
        %v565 = vld [vmem:[%s358 + $0x8] sm:$0xff]
        %v566 = vld [vmem:[%s358 + $0x10] sm:$0xff]
        %v567 = vld [vmem:[%s358 + $0x18] sm:$0xff]
        %v568 = vld [vmem:[#allocation7] sm:$0x3]
        %v569 = vpack.c.bf16 %v565, %v564
        %v570 = vpack.c.bf16 %v567, %v566
        %v571 = vld [vmem:[%s3] sm:$0xf]
        %573 = vset.pattern.permute.xlu0 0
        %574 = vperm.xlu0 %573, %v571
        %v575 = vpop.permute.xlu0 %574
        %vm577 = vcmask 261120
        %v579 = vsel %vm577, %v568, 0
        %581 = vmatprep.subr.bf16.mxu0 0
        %582 = vmatpush1.bf16.msra.mxu0 %v569
        %583 = vmatprep.subr.bf16.mxu0 0
        %584 = vmatpush1.bf16.msra.mxu0 %v570
        %585 = vmatprep.subr.bf16.mxu0 0
        %586 = vmatpush1.bf16.msra.mxu0 0
        %587 = vmatprep.subr.bf16.mxu0 0
        %588 = vmatpush1.bf16.msra.mxu0 0
        %589 = vmatprep.subr.bf16.mxu0 0
        %590 = vmatpush1.bf16.msra.mxu0 0
        %591 = vmatprep.subr.bf16.mxu0 0
        %592 = vmatpush1.bf16.msra.mxu0 0
        %593 = vmatprep.subr.bf16.mxu0 0
        %594 = vmatpush1.bf16.msra.mxu0 0
        %595 = vmatprep.subr.bf16.mxu0 0
        %596 = vmatpush1.bf16.msra.mxu0 0
        %597 = vmatprep.subr.bf16.mxu0 0
        %598 = vmatpush1.bf16.msra.mxu0 0
        %599 = vmatprep.subr.bf16.mxu0 0
        %600 = vmatpush1.bf16.msra.mxu0 0
        %601 = vmatprep.subr.bf16.mxu0 0
        %602 = vmatpush1.bf16.msra.mxu0 0
        %603 = vmatprep.subr.bf16.mxu0 0
        %604 = vmatpush1.bf16.msra.mxu0 0
        %605 = vmatprep.subr.bf16.mxu0 0
        %606 = vmatpush1.bf16.msra.mxu0 0
        %607 = vmatprep.subr.bf16.mxu0 0
        %608 = vmatpush1.bf16.msra.mxu0 0
        %609 = vmatprep.subr.bf16.mxu0 0
        %610 = vmatpush1.bf16.msra.mxu0 0
        %611 = vmatprep.subr.bf16.mxu0 0
        %612 = vmatpush1.bf16.msra.mxu0 0
        %613 = vmatprep.mubr.bf16.mxu0 0
        %614 = vmatmul.mubr.bf16.gmra.mrb[0].mxu0 %v579
        %v615 = vpop.f32.mrb[0].mxu0
        %v616 = vadd.f32 %v575, %v615
        %v617 = vpop.f32.mrb[0].mxu0
        %v618 = vpop.f32.mrb[0].mxu0
        %v619 = vpop.f32.mrb[0].mxu0
        %620 = vdwg.mxu0
        %v621 = vld [vmem:[#allocation2] sm:$0x3]
        %v622 = vpack.c.bf16 %v616, %v616
        %623 = vxpose.xlu0.c.b16.start [1/8] %v621, 128
        %624 = vxpose.xlu0.c.b16.cont [2/8] 0, 128
        %625 = vxpose.xlu0.c.b16.cont [3/8] 0, 128
        %626 = vxpose.xlu0.c.b16.cont [4/8] 0, 128
        %627 = vxpose.xlu0.c.b16.cont [5/8] 0, 128
        %628 = vxpose.xlu0.c.b16.cont [6/8] 0, 128
        %629 = vxpose.xlu0.c.b16.cont [7/8] 0, 128
        %630 = vxpose.xlu0.c.b16.end [8/8] 0, 128
        %v631 = vpop.trf.xlu0
        %v632 = vpop.trf.xlu0
        %v633 = vpop.trf.xlu0
        %v634 = vpop.trf.xlu0
        %v635 = vpop.trf.xlu0
        %v636 = vpop.trf.xlu0
        %v637 = vpop.trf.xlu0
        %v638 = vpop.trf.xlu0
        %vm639 = vcmask 31744
        %v641 = vsel %vm639, %v631, 0
        %v644 = vsel %vm639, %v632, 0
        %v647 = vsel %vm639, %v633, 0
        %v650 = vsel %vm639, %v634, 0
        %vm652 = vcmask 1041408
        %v654 = vsel %vm652, %v622, 0
        %656 = vmatprep.subr.bf16.mxu0 0
        %657 = vmatpush1.bf16.msra.mxu0 %v654
        %658 = vmatprep.subr.bf16.mxu0 0
        %659 = vmatpush1.bf16.msra.mxu0 0
        %660 = vmatprep.subr.bf16.mxu0 0
        %661 = vmatpush1.bf16.msra.mxu0 0
        %662 = vmatprep.subr.bf16.mxu0 0
        %663 = vmatpush1.bf16.msra.mxu0 0
        %664 = vmatprep.subr.bf16.mxu0 0
        %665 = vmatpush1.bf16.msra.mxu0 0
        %666 = vmatprep.subr.bf16.mxu0 0
        %667 = vmatpush1.bf16.msra.mxu0 0
        %668 = vmatprep.subr.bf16.mxu0 0
        %669 = vmatpush1.bf16.msra.mxu0 0
        %670 = vmatprep.subr.bf16.mxu0 0
        %671 = vmatpush1.bf16.msra.mxu0 0
        %672 = vmatprep.subr.bf16.mxu0 0
        %673 = vmatpush1.bf16.msra.mxu0 0
        %674 = vmatprep.subr.bf16.mxu0 0
        %675 = vmatpush1.bf16.msra.mxu0 0
        %676 = vmatprep.subr.bf16.mxu0 0
        %677 = vmatpush1.bf16.msra.mxu0 0
        %678 = vmatprep.subr.bf16.mxu0 0
        %679 = vmatpush1.bf16.msra.mxu0 0
        %680 = vmatprep.subr.bf16.mxu0 0
        %681 = vmatpush1.bf16.msra.mxu0 0
        %682 = vmatprep.subr.bf16.mxu0 0
        %683 = vmatpush1.bf16.msra.mxu0 0
        %684 = vmatprep.subr.bf16.mxu0 0
        %685 = vmatpush1.bf16.msra.mxu0 0
        %686 = vmatprep.subr.bf16.mxu0 0
        %687 = vmatpush1.bf16.msra.mxu0 0
        %688 = vmatprep.mubr.bf16.mxu0 0
        %689 = vmatmul.mubr.bf16.gmra.mrb[0].mxu0 %v641
        %v690 = vpop.f32.mrb[0].mxu0
        %v691 = vadd.f32 0.0, %v690
        %v692 = vpop.f32.mrb[0].mxu0
        %v693 = vpop.f32.mrb[0].mxu0
        %v694 = vadd.f32 0.0, %v693
        %v695 = vpop.f32.mrb[0].mxu0
        %696 = vmatprep.mubr.bf16.mxu0 0
        %697 = vmatmul.mubr.bf16.gmra.mrb[0].mxu0 %v644
        %v698 = vpop.f32.mrb[0].mxu0
        %v699 = vadd.f32 0.0, %v698
        %v700 = vpop.f32.mrb[0].mxu0
        %v701 = vpop.f32.mrb[0].mxu0
        %v702 = vadd.f32 0.0, %v701
        %v703 = vpop.f32.mrb[0].mxu0
        %704 = vmatprep.mubr.bf16.mxu0 0
        %705 = vmatmul.mubr.bf16.gmra.mrb[0].mxu0 %v647
        %v706 = vpop.f32.mrb[0].mxu0
        %v707 = vadd.f32 0.0, %v706
        %v708 = vpop.f32.mrb[0].mxu0
        %v709 = vpop.f32.mrb[0].mxu0
        %v710 = vadd.f32 0.0, %v709
        %v711 = vpop.f32.mrb[0].mxu0
        %712 = vmatprep.mubr.bf16.mxu0 0
        %713 = vmatmul.mubr.bf16.gmra.mrb[0].mxu0 %v650
        %v714 = vpop.f32.mrb[0].mxu0
        %v715 = vadd.f32 0.0, %v714
        %v716 = vpop.f32.mrb[0].mxu0
        %v717 = vpop.f32.mrb[0].mxu0
        %v718 = vadd.f32 0.0, %v717
        %v719 = vpop.f32.mrb[0].mxu0
        %720 = vdwg.mxu0
        %vm721 = vcmask 523264
        %v722 = vsel %vm721, %v691, -inf
        %v723 = vsel %vm721, %v694, -inf
        %v724 = vsel %vm721, %v699, -inf
        %v725 = vsel %vm721, %v702, -inf
        %v726 = vsel %vm721, %v707, -inf
        %v727 = vmax.f32 %v722, %v726
        %v728 = vsel %vm721, %v710, -inf
        %v729 = vmax.f32 %v723, %v728
        %v730 = vsel %vm721, %v715, -inf
        %v731 = vmax.f32 %v724, %v730
        %v732 = vsel %vm721, %v718, -inf
        %v733 = vmax.f32 %v725, %v732
        %v734 = vmax.f32 %v727, %v729
        %v735 = vmax.f32 %v731, %v733
        %v736 = vmax.f32 %v734, %v735
        %v737 = vrot.slane %v736, 4
        %v738 = vmax.f32 %v736, %v737
        %v739 = vrot.slane %v738, 2
        %v740 = vmax.f32 %v738, %v739
        %v741 = vrot.slane %v740, 1
        %v742 = vmax.f32 %v740, %v741
        %v743 = vsub.f32 %v691, %v742
        %v744 = vsub.f32 %v694, %v742
        %v745 = vsub.f32 %v699, %v742
        %v746 = vsub.f32 %v702, %v742
        %v747 = vsub.f32 %v707, %v742
        %v748 = vsub.f32 %v710, %v742
        %v749 = vsub.f32 %v715, %v742
        %v750 = vsub.f32 %v718, %v742
        %v751 = vmul.f32 %v743, 1.442695
        %v752 = vpow.pop %v751
        %v753 = vmul.f32 %v744, 1.442695
        %v754 = vpow.pop %v753
        %v755 = vmul.f32 %v745, 1.442695
        %v756 = vpow.pop %v755
        %v757 = vmul.f32 %v746, 1.442695
        %v758 = vpow.pop %v757
        %v759 = vmul.f32 %v747, 1.442695
        %v760 = vpow.pop %v759
        %v761 = vmul.f32 %v748, 1.442695
        %v762 = vpow.pop %v761
        %v763 = vmul.f32 %v749, 1.442695
        %v764 = vpow.pop %v763
        %v765 = vmul.f32 %v750, 1.442695
        %v766 = vpow.pop %v765
        %v767 = vsel %vm721, %v752, 0.0
        %v768 = vsel %vm721, %v754, 0.0
        %v769 = vadd.f32 %v767, %v768
        %v770 = vsel %vm721, %v756, 0.0
        %v771 = vadd.f32 %v769, %v770
        %v772 = vsel %vm721, %v758, 0.0
        %v773 = vadd.f32 %v771, %v772
        %v774 = vsel %vm721, %v760, 0.0
        %v775 = vadd.f32 %v773, %v774
        %v776 = vsel %vm721, %v762, 0.0
        %v777 = vadd.f32 %v775, %v776
        %v778 = vsel %vm721, %v764, 0.0
        %v779 = vadd.f32 %v777, %v778
        %v780 = vsel %vm721, %v766, 0.0
        %v781 = vadd.f32 %v779, %v780
        %v782 = vrot.slane %v781, 4
        %v783 = vadd.f32 %v781, %v782
        %v784 = vrot.slane %v783, 2
        %v785 = vadd.f32 %v783, %v784
        %v786 = vrot.slane %v785, 1
        %v787 = vadd.f32 %v785, %v786
        %v788 = vld [vmem:[#allocation3] sm:$0xff]
        %v789 = vld [vmem:[#allocation3 + $0x8] sm:$0xff]
        %v790 = vpack.c.bf16 %v754, %v752
        %v791 = vpack.c.bf16 %v758, %v756
        %v792 = vpack.c.bf16 %v762, %v760
        %v793 = vpack.c.bf16 %v766, %v764
        %v795 = vsel %vm721, %v788, 0
        %v798 = vsel %vm721, %v789, 0
        %800 = vmatprep.subr.bf16.mxu0 0
        %801 = vmatpush1.bf16.msra.mxu0 %v790
        %802 = vmatprep.subr.bf16.mxu0 0
        %803 = vmatpush1.bf16.msra.mxu0 %v791
        %804 = vmatprep.subr.bf16.mxu0 0
        %805 = vmatpush1.bf16.msra.mxu0 %v792
        %806 = vmatprep.subr.bf16.mxu0 0
        %807 = vmatpush1.bf16.msra.mxu0 %v793
        %808 = vmatprep.subr.bf16.mxu0 0
        %809 = vmatpush1.bf16.msra.mxu0 0
        %810 = vmatprep.subr.bf16.mxu0 0
        %811 = vmatpush1.bf16.msra.mxu0 0
        %812 = vmatprep.subr.bf16.mxu0 0
        %813 = vmatpush1.bf16.msra.mxu0 0
        %814 = vmatprep.subr.bf16.mxu0 0
        %815 = vmatpush1.bf16.msra.mxu0 0
        %816 = vmatprep.subr.bf16.mxu0 0
        %817 = vmatpush1.bf16.msra.mxu0 0
        %818 = vmatprep.subr.bf16.mxu0 0
        %819 = vmatpush1.bf16.msra.mxu0 0
        %820 = vmatprep.subr.bf16.mxu0 0
        %821 = vmatpush1.bf16.msra.mxu0 0
        %822 = vmatprep.subr.bf16.mxu0 0
        %823 = vmatpush1.bf16.msra.mxu0 0
        %824 = vmatprep.subr.bf16.mxu0 0
        %825 = vmatpush1.bf16.msra.mxu0 0
        %826 = vmatprep.subr.bf16.mxu0 0
        %827 = vmatpush1.bf16.msra.mxu0 0
        %828 = vmatprep.subr.bf16.mxu0 0
        %829 = vmatpush1.bf16.msra.mxu0 0
        %830 = vmatprep.subr.bf16.mxu0 0
        %831 = vmatpush1.bf16.msra.mxu0 0
        %832 = vmatprep.mubr.bf16.mxu0 0
        %833 = vmatmul.mubr.bf16.gmra.mrb[0].mxu0 %v795
        %v834 = vpop.f32.mrb[0].mxu0
        %v835 = vadd.f32 0.0, %v834
        %v836 = vpop.f32.mrb[0].mxu0
        %v837 = vpop.f32.mrb[0].mxu0
        %v838 = vadd.f32 0.0, %v837
        %v839 = vpop.f32.mrb[0].mxu0
        %840 = vmatprep.mubr.bf16.mxu0 0
        %841 = vmatmul.mubr.bf16.gmra.mrb[0].mxu0 %v798
        %v842 = vpop.f32.mrb[0].mxu0
        %v843 = vadd.f32 0.0, %v842
        %v844 = vpop.f32.mrb[0].mxu0
        %v845 = vpop.f32.mrb[0].mxu0
        %v846 = vadd.f32 0.0, %v845
        %v847 = vpop.f32.mrb[0].mxu0
        %848 = vdwg.mxu0
        %v849 = vrcp.pop %v787
        %v850 = vmul.f32 %v835, %v849
        %v851 = vmul.f32 %v838, %v849
        %v852 = vmul.f32 %v843, %v849
        %v853 = vmul.f32 %v846, %v849
        %v854 = vadd.f32 %v564, %v850
        %v855 = vadd.f32 %v565, %v851
        %v856 = vadd.f32 %v566, %v852
        %v857 = vadd.f32 %v567, %v853
        %858 = vst.msk [vmem:[%s395] sm:$0xff] %vm721, %v854
        %859 = vst.msk [vmem:[%s395 + $0x8] sm:$0xff] %vm721, %v855
        %860 = vst.msk [vmem:[%s395 + $0x10] sm:$0xff] %vm721, %v856
        %861 = vst.msk [vmem:[%s395 + $0x18] sm:$0xff] %vm721, %v857
        %s862 = sand.u32 %s229, 1
        %s863 = scalar_lea.sflag [#allocation6], %s862
        %s864 = sand.u32 %s229, 1
        %s865 = smul.addr %s864, 32
        %s866 = scalar_lea.vmem [#allocation12], %s865
        // Predicated region
        $region73: #{tpu_custom_call.1} parent=51 // pred_check
          %p867 = pneg %p239
        $region74: #{tpu_custom_call.1} parent=51 // pred_check_branch
          %869 = sbr.rel (%p867) target = $region76
        $region75: #{tpu_custom_call.1} parent=51 // pred_region
          %s871 = ssub.s32 512, 512
          %872 = vsyncadd %s863, %s871
          %s873 = smul.addr %s31, 4
          %s874 = sadd.s32 %s32, %s873
          %s875 = smul.addr %s874, 128
          %s876 = scalar_lea.hbm %s8, %s875
          %s877 = sshll.u32 %s866, 4
          %s878 = int_to_ptr.vmem [resolvable:$true] %s877
          %883 = dma.vmem_to_hbm [thread:$0]  %s878, 512, %s876, %s863, 128, 128, 8
        $region76: #{tpu_custom_call.1} parent=51 // pred_fallthru
          _
      $region52: #{tpu_custom_call.1} parent=5 // pred_fallthru
        _
      %p884 = scmp.le.s32.totalorder 2, %s22
      // Predicated region
      $region77: #{tpu_custom_call.1} parent=5 // pred_check
        %p885 = pneg %p884
      $region78: #{tpu_custom_call.1} parent=5 // pred_check_branch
        %887 = sbr.rel (%p885) target = $region80
      $region79: #{tpu_custom_call.1} parent=5 // pred_region
        %s888 = ssub.s32 %s22, 2
        // Predicated region
        $region81: #{tpu_custom_call.1} parent=79 // pred_check
          %p889 = pneg %p245
        $region82: #{tpu_custom_call.1} parent=79 // pred_check_branch
          %891 = sbr.rel (%p889) target = $region84
        $region83: #{tpu_custom_call.1} parent=79 // pred_region
          %s892 = sand.u32 %s230, 1
          %s893 = scalar_lea.sflag [#allocation6], %s892
          %s894 = sand.u32 %s230, 1
          %s895 = smul.addr %s894, 32
          %s896 = scalar_lea.vmem [#allocation12], %s895
          %897 = dma.done %s893, 512
        $region84: #{tpu_custom_call.1} parent=79 // pred_fallthru
          _
      $region80: #{tpu_custom_call.1} parent=5 // pred_fallthru
        _
    $region6: #{tpu_custom_call.1} parent=1 // loop_footer
      %s26 = sadd.s32 1, %s22
    $region7: #{tpu_custom_call.1} parent=1 // loop_footer_branch
      %21 = sbr.rel target = $region3
    $region8: #{tpu_custom_call.1} parent=1 // loop_exit
      _
    %898 = vsyncpa [#allocation5], 1
    %s899 = scalar_lea.sflag [#allocation5], 1
    %900 = vsyncpa %s899, 1
    %901 = vsyncpa [#allocation8], 1
    %902 = vsyncpa [#allocation11], 1
    %s903 = scalar_lea.sflag [#allocation11], 1
    %904 = vsyncpa %s903, 1
    %905 = vsyncpa [#allocation6], 1
    %s906 = scalar_lea.sflag [#allocation6], 1
    %907 = vsyncpa %s906, 1

</llo_original>
